<compile_context>
chip_gen: v7x
topology: tpu7x:2x2x1
jax: 0.10.0
libtpu: 0.0.40
codegen_flags: <defaults>
</compile_context>

<pallas_src>
import math

import jax
import jax.numpy as jnp
from jax import lax
from jax.experimental import pallas as pl
from jax.experimental.pallas import tpu as pltpu


# ----------------------------- fused MHA kernel -----------------------------

def _mha_kernel(vlen_ref,                 # (B,) int32 in SMEM (scalar prefetch)
                q_ref, k_ref, v_ref,      # (BB,Tq,D) / (BB,Tk,D) / (BB,Tk,D)
                wq_ref, wk_ref, wv_ref,   # (1,D,dh) bf16 per-head weight slices
                wo_ref,                   # (1,dh,D) bf16 per-head output-proj slice
                o_ref,                    # (BB,Tq,D) output block (revisited across heads)
                acc_ref,                  # (BB,Tq,D) f32 scratch accumulator
                bias_ref):                # (BB,1,Tk) f32 scratch additive mask bias
    b_blk = pl.program_id(0)
    h = pl.program_id(1)

    BB, Tq, D = q_ref.shape
    Tk = k_ref.shape[1]
    dh = wq_ref.shape[2]
    bf16 = jnp.bfloat16
    f32 = jnp.float32

    # Per-batch-block init (runs at the first head only): zero the accumulator and build the
    # additive mask bias once; it only depends on the batch rows, not on the head/query pos.
    # Note: additive -1e6 bias matches d2l's masked_softmax for any valid_len >= 1 (exp
    # underflows to 0); only the degenerate all-masked (valid_len == 0) row differs.
    @pl.when(h == 0)
    def _init():
        acc_ref[...] = jnp.zeros_like(acc_ref)
        col = lax.broadcasted_iota(jnp.int32, (1, Tk), 1)
        for i in range(BB):                       # BB is small & static
            vlen_i = vlen_ref[b_blk * BB + i]     # dynamic SMEM scalar read
            bias_ref[i] = jnp.where(col < vlen_i, 0.0, -1e6).astype(f32)

    # Flatten batch rows into M for the projections (rows-per-step sized for MXU fill) and
    # cast MXU operands to bf16; f32 accumulation via preferred_element_type.
    xq = q_ref[...].reshape(BB * Tq, D).astype(bf16)
    xk = k_ref[...].reshape(BB * Tk, D).astype(bf16)
    xv = v_ref[...].reshape(BB * Tk, D).astype(bf16)

    # Per-head projections: full-K (=D) matmuls; the (D,dh) weight slice came in via BlockSpec
    # (no in-kernel lane slicing). Wq is pre-scaled by 1/sqrt(dh) in the wrapper.
    q_h = jnp.dot(xq, wq_ref[0], preferred_element_type=f32).reshape(BB, Tq, dh)
    k_h = jnp.dot(xk, wk_ref[0], preferred_element_type=f32).reshape(BB, Tk, dh)
    v_h = jnp.dot(xv, wv_ref[0], preferred_element_type=f32).reshape(BB, Tk, dh)

    # Scores: batched NT matmul (contract last dims; K never transposed).
    s = jnp.einsum('bqd,bkd->bqk', q_h.astype(bf16), k_h.astype(bf16),
                   preferred_element_type=f32)                      # (BB,Tq,Tk) f32
    s = s + bias_ref[...]                                           # broadcast over Tq

    # Softmax in f32 (max-subtracted); reciprocal on the EUP slot.
    s = s - jnp.max(s, axis=-1, keepdims=True)
    p = jnp.exp(s)
    p = p * pl.reciprocal(jnp.sum(p, axis=-1, keepdims=True), approx=True)

    ctx = jnp.einsum('bqk,bkd->bqd', p.astype(bf16), v_h.astype(bf16),
                     preferred_element_type=f32)                    # (BB,Tq,dh) f32

    # Head merge + Wo fused: acc += ctx_h @ Wo[h]; no VMEM ctx round-trip, no dh-wide stores.
    acc_ref[...] += jnp.dot(ctx.reshape(BB * Tq, dh).astype(bf16), wo_ref[0],
                            preferred_element_type=f32).reshape(BB, Tq, D)

    # Single lane-dense store of the finished block (last dim = full D).
    @pl.when(h == pl.num_programs(1) - 1)
    def _finalize():
        o_ref[...] = acc_ref[...].astype(o_ref.dtype)


# ----------------------------- wrapper -----------------------------

def _pick_batch_block(batch, tq, target_rows=256):
    """Largest divisor of `batch` whose row count (bb*Tq) stays near the MXU-filling target."""
    bb = max(1, min(batch, max(1, target_rows // max(tq, 1))))
    while batch % bb:
        bb -= 1
    return bb


def multi_head_attention(queries, keys, values, valid_lens, params, num_heads):
    """Mirrors MultiHeadAttention.forward (bias=False, eval-mode dropout)."""
    Wq, Wk, Wv, Wo = params
    B, Tq, D = queries.shape
    Tk = keys.shape[1]
    assert D % num_heads == 0
    dh = D // num_heads

    bb = _pick_batch_block(B, Tq)
    n_bblk = B // bb

    f32, bf16 = jnp.float32, jnp.bfloat16
    # One-time weight prep (outside the kernel): bake 1/sqrt(dh) into Wq, reshape per-head so
    # BlockSpecs can deliver (D,dh)/(dh,D) slices, cast to bf16 (halves weight VMEM/HBM bytes).
    wq = ((Wq.astype(f32) * (1.0 / math.sqrt(dh)))
          .reshape(D, num_heads, dh).transpose(1, 0, 2).astype(bf16))   # (H, D, dh)
    wk = Wk.astype(f32).reshape(D, num_heads, dh).transpose(1, 0, 2).astype(bf16)
    wv = Wv.astype(f32).reshape(D, num_heads, dh).transpose(1, 0, 2).astype(bf16)
    wo = Wo.astype(f32).reshape(num_heads, dh, D).astype(bf16)          # (H, dh, D)

    vlens = valid_lens.astype(jnp.int32)  # (B,) -> SMEM scalar prefetch, no per-head repeat

    grid_spec = pltpu.PrefetchScalarGridSpec(
        num_scalar_prefetch=1,
        grid=(n_bblk, num_heads),
        in_specs=[
            pl.BlockSpec((bb, Tq, D), lambda b, h, vl: (b, 0, 0)),   # queries (const over h)
            pl.BlockSpec((bb, Tk, D), lambda b, h, vl: (b, 0, 0)),   # keys
            pl.BlockSpec((bb, Tk, D), lambda b, h, vl: (b, 0, 0)),   # values
            pl.BlockSpec((1, D, dh), lambda b, h, vl: (h, 0, 0)),    # Wq[h] (pre-scaled)
            pl.BlockSpec((1, D, dh), lambda b, h, vl: (h, 0, 0)),    # Wk[h]
            pl.BlockSpec((1, D, dh), lambda b, h, vl: (h, 0, 0)),    # Wv[h]
            pl.BlockSpec((1, dh, D), lambda b, h, vl: (h, 0, 0)),    # Wo[h]
        ],
        out_specs=pl.BlockSpec((bb, Tq, D), lambda b, h, vl: (b, 0, 0)),
        scratch_shapes=[pltpu.VMEM((bb, Tq, D), f32),    # per-block f32 output accumulator
                        pltpu.VMEM((bb, 1, Tk), f32)],   # cached additive mask bias
    )

    return pl.pallas_call(
        _mha_kernel,
        out_shape=jax.ShapeDtypeStruct((B, Tq, D), queries.dtype),
        grid_spec=grid_spec,
        compiler_params=pltpu.CompilerParams(
            # batch blocks are independent -> megacore-shardable on v7x; head axis is a
            # reduction into the output accumulator -> "arbitrary".
            dimension_semantics=("parallel", "arbitrary"),
            vmem_limit_bytes=32 * 1024 * 1024,   # safe on v5e/v6e/v7x; re-derive for prod D
        ),
    )(vlens, queries, keys, values, wq, wk, wv, wo)


# ----------------------------- pure-JAX reference (module semantics, f32) -----------------------------

def reference_mha(queries, keys, values, valid_lens, params, num_heads):
    Wq, Wk, Wv, Wo = params
    B, Tq, D = queries.shape
    dh = D // num_heads

    def split(x):
        Bx, T, _ = x.shape
        return x.reshape(Bx, T, num_heads, dh).transpose(0, 2, 1, 3).reshape(
            Bx * num_heads, T, dh)

    q, k, v = split(queries @ Wq), split(keys @ Wk), split(values @ Wv)
    vlens = jnp.repeat(valid_lens.astype(jnp.int32), num_heads)
    scores = jnp.einsum("bqd,bkd->bqk", q, k) / math.sqrt(dh)
    col = jnp.arange(scores.shape[-1])[None, None, :]
    scores = jnp.where(col < vlens[:, None, None], scores, -1000000.0)
    p = jax.nn.softmax(scores, axis=-1)
    out = jnp.einsum("bqk,bkd->bqd", p, v)
    out = out.reshape(B, num_heads, Tq, dh).transpose(0, 2, 1, 3).reshape(B, Tq, D)
    return out @ Wo


# ----------------------------- main -----------------------------

if __name__ == "__main__":
    B, Tq, Tk = 2, 8, 8
    num_hiddens, num_heads = 32, 4

    key = jax.random.PRNGKey(0)
    kq, kk, kv, kwq, kwk, kwv, kwo = jax.random.split(key, 7)

    queries = jax.random.normal(kq, (B, Tq, num_hiddens), dtype=jnp.float32)
    keys = jax.random.normal(kk, (B, Tk, num_hiddens), dtype=jnp.float32)
    values = jax.random.normal(kv, (B, Tk, num_hiddens), dtype=jnp.float32)
    valid_lens = jnp.array([3, 6], dtype=jnp.int32)

    # Deterministic parameter init (LazyLinear(num_hiddens, bias=False) -> (D, D) weights).
    scale = 1.0 / math.sqrt(num_hiddens)
    Wq = jax.random.uniform(kwq, (num_hiddens, num_hiddens), jnp.float32, -scale, scale)
    Wk = jax.random.uniform(kwk, (num_hiddens, num_hiddens), jnp.float32, -scale, scale)
    Wv = jax.random.uniform(kwv, (num_hiddens, num_hiddens), jnp.float32, -scale, scale)
    Wo = jax.random.uniform(kwo, (num_hiddens, num_hiddens), jnp.float32, -scale, scale)
    params = (Wq, Wk, Wv, Wo)

    out = multi_head_attention(queries, keys, values, valid_lens, params, num_heads)
    out = jax.block_until_ready(out)

    ref = reference_mha(queries, keys, values, valid_lens, params, num_heads)
    assert out.shape == (B, Tq, num_hiddens)
    # Tolerance covers bf16 MXU-operand rounding (weights + activations cast to bf16, f32
    # accumulation) plus the EUP approximate reciprocal in the softmax denominator; the f32
    # reference implements the exact PyTorch-module semantics. Real bugs show up as O(0.1+).
    assert jnp.allclose(out, ref, atol=5e-2, rtol=5e-2), "mismatch vs reference"

    print("KERNEL_OK")
</pallas_src>

<mosaic_0001>
module attributes {stable_mosaic.version = 11 : i64} {
  func.func @_mha_kernel(%arg0: i32, %arg1: i32, %arg2: memref<2xi32, #tpu.memory_space<smem>>, %arg3: memref<2x8x32xf32, #tpu.memory_space<vmem>>, %arg4: memref<2x8x32xf32, #tpu.memory_space<vmem>>, %arg5: memref<2x8x32xf32, #tpu.memory_space<vmem>>, %arg6: memref<1x32x8xbf16, #tpu.memory_space<vmem>>, %arg7: memref<1x32x8xbf16, #tpu.memory_space<vmem>>, %arg8: memref<1x32x8xbf16, #tpu.memory_space<vmem>>, %arg9: memref<1x8x32xbf16, #tpu.memory_space<vmem>>, %arg10: memref<2x8x32xf32, #tpu.memory_space<vmem>>, %arg11: memref<2x8x32xf32, #tpu.memory_space<vmem>>, %arg12: memref<2x1x8xf32, #tpu.memory_space<vmem>>) attributes {dimension_semantics = [#tpu.dimension_semantics<parallel>, #tpu.dimension_semantics<arbitrary>], iteration_bounds = array<i64: 1, 4>, scalar_prefetch = 1 : i64, scratch_operands = 2 : i64, tpu.core_type = #tpu.core_type<tc>, window_params = [{transform_indices = @transform_0, window_bounds = array<i64: 2, 8, 32>}, {transform_indices = @transform_1, window_bounds = array<i64: 2, 8, 32>}, {transform_indices = @transform_2, window_bounds = array<i64: 2, 8, 32>}, {transform_indices = @transform_3, window_bounds = array<i64: 1, 32, 8>}, {transform_indices = @transform_4, window_bounds = array<i64: 1, 32, 8>}, {transform_indices = @transform_5, window_bounds = array<i64: 1, 32, 8>}, {transform_indices = @transform_6, window_bounds = array<i64: 1, 8, 32>}, {transform_indices = @transform_7, window_bounds = array<i64: 2, 8, 32>}]} {
    %c0_i32 = arith.constant 0 : i32
    %0 = arith.cmpi eq, %arg1, %c0_i32 : i32
    %1 = arith.extui %0 : i1 to i32
    %c0_i32_0 = arith.constant 0 : i32
    %2 = arith.cmpi ne, %1, %c0_i32_0 : i32
    scf.if %2 {
      %cst_38 = arith.constant 0.000000e+00 : f32
      %55 = vector.broadcast %cst_38 : f32 to vector<2x8x32xf32>
      %c0_39 = arith.constant 0 : index
      %c0_40 = arith.constant 0 : index
      %c0_41 = arith.constant 0 : index
      %56 = vector.load %arg11[%c0_39, %c0_40, %c0_41] : memref<2x8x32xf32, #tpu.memory_space<vmem>>, vector<2x8x32xf32>
      tpu.vector_store %arg11[%c0_39, %c0_40, %c0_41], %55 {strides = array<i32>} : memref<2x8x32xf32, #tpu.memory_space<vmem>>, vector<2x8x32xf32>,
      %57 = tpu.iota {dimensions = array<i32: 1>} : vector<1x8xi32>
      %c2_i32 = arith.constant 2 : i32
      %58 = arith.muli %arg0, %c2_i32 : i32
      %c0_i32_42 = arith.constant 0 : i32
      %59 = arith.addi %58, %c0_i32_42 : i32
      %60 = arith.index_cast %59 : i32 to index
      %61 = memref.load %arg2[%60] : memref<2xi32, #tpu.memory_space<smem>>
      %62 = vector.broadcast %61 : i32 to vector<1x8xi32>
      %63 = arith.cmpi slt, %57, %62 : vector<1x8xi32>
      %cst_43 = arith.constant 0.000000e+00 : f32
      %cst_44 = arith.constant -1.000000e+06 : f32
      %64 = vector.broadcast %cst_43 : f32 to vector<1x8xf32>
      %65 = vector.broadcast %cst_44 : f32 to vector<1x8xf32>
      %66 = arith.select %63, %64, %65 : vector<1x8xi1>, vector<1x8xf32>
      %c0_45 = arith.constant 0 : index
      %c0_46 = arith.constant 0 : index
      %c0_47 = arith.constant 0 : index
      %67 = vector.load %arg12[%c0_45, %c0_46, %c0_47] : memref<2x1x8xf32, #tpu.memory_space<vmem>>, vector<1x1x8xf32>
      %68 = vector.shape_cast %67 : vector<1x1x8xf32> to vector<1x8xf32>
      %69 = vector.shape_cast %66 : vector<1x8xf32> to vector<1x1x8xf32>
      tpu.vector_store %arg12[%c0_45, %c0_46, %c0_47], %69 {strides = array<i32>} : memref<2x1x8xf32, #tpu.memory_space<vmem>>, vector<1x1x8xf32>,
      %c2_i32_48 = arith.constant 2 : i32
      %70 = arith.muli %arg0, %c2_i32_48 : i32
      %c1_i32 = arith.constant 1 : i32
      %71 = arith.addi %70, %c1_i32 : i32
      %72 = arith.index_cast %71 : i32 to index
      %73 = memref.load %arg2[%72] : memref<2xi32, #tpu.memory_space<smem>>
      %74 = vector.broadcast %73 : i32 to vector<1x8xi32>
      %75 = arith.cmpi slt, %57, %74 : vector<1x8xi32>
      %cst_49 = arith.constant 0.000000e+00 : f32
      %cst_50 = arith.constant -1.000000e+06 : f32
      %76 = vector.broadcast %cst_49 : f32 to vector<1x8xf32>
      %77 = vector.broadcast %cst_50 : f32 to vector<1x8xf32>
      %78 = arith.select %75, %76, %77 : vector<1x8xi1>, vector<1x8xf32>
      %c1 = arith.constant 1 : index
      %c0_51 = arith.constant 0 : index
      %c0_52 = arith.constant 0 : index
      %79 = vector.load %arg12[%c1, %c0_51, %c0_52] : memref<2x1x8xf32, #tpu.memory_space<vmem>>, vector<1x1x8xf32>
      %80 = vector.shape_cast %79 : vector<1x1x8xf32> to vector<1x8xf32>
      %81 = vector.shape_cast %78 : vector<1x8xf32> to vector<1x1x8xf32>
      tpu.vector_store %arg12[%c1, %c0_51, %c0_52], %81 {strides = array<i32>} : memref<2x1x8xf32, #tpu.memory_space<vmem>>, vector<1x1x8xf32>,
    } else {
    }
    %c0 = arith.constant 0 : index
    %c0_1 = arith.constant 0 : index
    %c0_2 = arith.constant 0 : index
    %3 = vector.load %arg3[%c0, %c0_1, %c0_2] : memref<2x8x32xf32, #tpu.memory_space<vmem>>, vector<2x8x32xf32>
    %4 = vector.shape_cast %3 : vector<2x8x32xf32> to vector<16x32xf32>
    %5 = arith.truncf %4 : vector<16x32xf32> to vector<16x32xbf16>
    %c0_3 = arith.constant 0 : index
    %c0_4 = arith.constant 0 : index
    %c0_5 = arith.constant 0 : index
    %6 = vector.load %arg4[%c0_3, %c0_4, %c0_5] : memref<2x8x32xf32, #tpu.memory_space<vmem>>, vector<2x8x32xf32>
    %7 = vector.shape_cast %6 : vector<2x8x32xf32> to vector<16x32xf32>
    %8 = arith.truncf %7 : vector<16x32xf32> to vector<16x32xbf16>
    %c0_6 = arith.constant 0 : index
    %c0_7 = arith.constant 0 : index
    %c0_8 = arith.constant 0 : index
    %9 = vector.load %arg5[%c0_6, %c0_7, %c0_8] : memref<2x8x32xf32, #tpu.memory_space<vmem>>, vector<2x8x32xf32>
    %10 = vector.shape_cast %9 : vector<2x8x32xf32> to vector<16x32xf32>
    %11 = arith.truncf %10 : vector<16x32xf32> to vector<16x32xbf16>
    %c0_9 = arith.constant 0 : index
    %c0_10 = arith.constant 0 : index
    %c0_11 = arith.constant 0 : index
    %12 = vector.load %arg6[%c0_9, %c0_10, %c0_11] : memref<1x32x8xbf16, #tpu.memory_space<vmem>>, vector<1x32x8xbf16>
    %13 = vector.shape_cast %12 : vector<1x32x8xbf16> to vector<32x8xbf16>
    %cst = arith.constant dense<0.000000e+00> : vector<16x8xf32>
    %14 = tpu.matmul %5, %13, %cst {dimension_numbers = #tpu.dot_dimension_numbers<[1], [0], [0], [1], [0, 0, 1, 1], [], []>} : vector<16x32xbf16>, vector<32x8xbf16>, vector<16x8xf32> -> vector<16x8xf32>
    %15 = vector.shape_cast %14 : vector<16x8xf32> to vector<2x8x8xf32>
    %c0_12 = arith.constant 0 : index
    %c0_13 = arith.constant 0 : index
    %c0_14 = arith.constant 0 : index
    %16 = vector.load %arg7[%c0_12, %c0_13, %c0_14] : memref<1x32x8xbf16, #tpu.memory_space<vmem>>, vector<1x32x8xbf16>
    %17 = vector.shape_cast %16 : vector<1x32x8xbf16> to vector<32x8xbf16>
    %cst_15 = arith.constant dense<0.000000e+00> : vector<16x8xf32>
    %18 = tpu.matmul %8, %17, %cst_15 {dimension_numbers = #tpu.dot_dimension_numbers<[1], [0], [0], [1], [0, 0, 1, 1], [], []>} : vector<16x32xbf16>, vector<32x8xbf16>, vector<16x8xf32> -> vector<16x8xf32>
    %19 = vector.shape_cast %18 : vector<16x8xf32> to vector<2x8x8xf32>
    %c0_16 = arith.constant 0 : index
    %c0_17 = arith.constant 0 : index
    %c0_18 = arith.constant 0 : index
    %20 = vector.load %arg8[%c0_16, %c0_17, %c0_18] : memref<1x32x8xbf16, #tpu.memory_space<vmem>>, vector<1x32x8xbf16>
    %21 = vector.shape_cast %20 : vector<1x32x8xbf16> to vector<32x8xbf16>
    %cst_19 = arith.constant dense<0.000000e+00> : vector<16x8xf32>
    %22 = tpu.matmul %11, %21, %cst_19 {dimension_numbers = #tpu.dot_dimension_numbers<[1], [0], [0], [1], [0, 0, 1, 1], [], []>} : vector<16x32xbf16>, vector<32x8xbf16>, vector<16x8xf32> -> vector<16x8xf32>
    %23 = vector.shape_cast %22 : vector<16x8xf32> to vector<2x8x8xf32>
    %24 = arith.truncf %15 : vector<2x8x8xf32> to vector<2x8x8xbf16>
    %25 = arith.truncf %19 : vector<2x8x8xf32> to vector<2x8x8xbf16>
    "tpu.trace_start"() <{level = 10 : i32, message = "bqd,bkd->bqk"}> : () -> ()
    %cst_20 = arith.constant dense<0.000000e+00> : vector<2x8x8xf32>
    %26 = tpu.matmul %24, %25, %cst_20 {dimension_numbers = #tpu.dot_dimension_numbers<[2], [2], [1], [1], [0, 0, 0, 1, 1, 1], [0], [0]>} : vector<2x8x8xbf16>, vector<2x8x8xbf16>, vector<2x8x8xf32> -> vector<2x8x8xf32>
    "tpu.trace_stop"() : () -> ()
    %c0_21 = arith.constant 0 : index
    %c0_22 = arith.constant 0 : index
    %c0_23 = arith.constant 0 : index
    %27 = vector.load %arg12[%c0_21, %c0_22, %c0_23] : memref<2x1x8xf32, #tpu.memory_space<vmem>>, vector<2x1x8xf32>
    %28 = vector.broadcast %27 : vector<2x1x8xf32> to vector<2x8x8xf32>
    %29 = arith.addf %26, %28 : vector<2x8x8xf32>
    %cst_24 = arith.constant dense<0xFF800000> : vector<2x8xf32>
    %30 = vector.multi_reduction <maximumf>, %29, %cst_24 [2] : vector<2x8x8xf32> to vector<2x8xf32>
    %31 = vector.shape_cast %30 : vector<2x8xf32> to vector<2x8x1xf32>
    %32 = vector.broadcast %31 : vector<2x8x1xf32> to vector<2x8x8xf32>
    %33 = arith.subf %29, %32 : vector<2x8x8xf32>
    %34 = math.exp %33 : vector<2x8x8xf32>
    %cst_25 = arith.constant dense<0.000000e+00> : vector<2x8xf32>
    %35 = vector.multi_reduction <add>, %34, %cst_25 [2] : vector<2x8x8xf32> to vector<2x8xf32>
    %36 = vector.shape_cast %35 : vector<2x8xf32> to vector<2x8x1xf32>
    %37 = tpu.reciprocal %36 {approx = true} : vector<2x8x1xf32> -> vector<2x8x1xf32>
    %38 = vector.broadcast %37 : vector<2x8x1xf32> to vector<2x8x8xf32>
    %39 = arith.mulf %34, %38 : vector<2x8x8xf32>
    %40 = arith.truncf %39 : vector<2x8x8xf32> to vector<2x8x8xbf16>
    %41 = arith.truncf %23 : vector<2x8x8xf32> to vector<2x8x8xbf16>
    "tpu.trace_start"() <{level = 10 : i32, message = "bqk,bkd->bqd"}> : () -> ()
    %cst_26 = arith.constant dense<0.000000e+00> : vector<2x8x8xf32>
    %42 = tpu.matmul %40, %41, %cst_26 {dimension_numbers = #tpu.dot_dimension_numbers<[2], [1], [1], [2], [0, 0, 0, 1, 1, 2], [0], [0]>} : vector<2x8x8xbf16>, vector<2x8x8xbf16>, vector<2x8x8xf32> -> vector<2x8x8xf32>
    "tpu.trace_stop"() : () -> ()
    %c0_27 = arith.constant 0 : index
    %c0_28 = arith.constant 0 : index
    %c0_29 = arith.constant 0 : index
    %43 = vector.load %arg11[%c0_27, %c0_28, %c0_29] : memref<2x8x32xf32, #tpu.memory_space<vmem>>, vector<2x8x32xf32>
    %44 = vector.shape_cast %42 : vector<2x8x8xf32> to vector<16x8xf32>
    %45 = arith.truncf %44 : vector<16x8xf32> to vector<16x8xbf16>
    %c0_30 = arith.constant 0 : index
    %c0_31 = arith.constant 0 : index
    %c0_32 = arith.constant 0 : index
    %46 = vector.load %arg9[%c0_30, %c0_31, %c0_32] : memref<1x8x32xbf16, #tpu.memory_space<vmem>>, vector<1x8x32xbf16>
    %47 = vector.shape_cast %46 : vector<1x8x32xbf16> to vector<8x32xbf16>
    %cst_33 = arith.constant dense<0.000000e+00> : vector<16x32xf32>
    %48 = tpu.matmul %45, %47, %cst_33 {dimension_numbers = #tpu.dot_dimension_numbers<[1], [0], [0], [1], [0, 0, 1, 1], [], []>} : vector<16x8xbf16>, vector<8x32xbf16>, vector<16x32xf32> -> vector<16x32xf32>
    %49 = vector.shape_cast %48 : vector<16x32xf32> to vector<2x8x32xf32>
    %50 = arith.addf %43, %49 : vector<2x8x32xf32>
    %c0_34 = arith.constant 0 : index
    %c0_35 = arith.constant 0 : index
    %c0_36 = arith.constant 0 : index
    %51 = vector.load %arg11[%c0_34, %c0_35, %c0_36] : memref<2x8x32xf32, #tpu.memory_space<vmem>>, vector<2x8x32xf32>
    tpu.vector_store %arg11[%c0_34, %c0_35, %c0_36], %50 {strides = array<i32>} : memref<2x8x32xf32, #tpu.memory_space<vmem>>, vector<2x8x32xf32>,
    %c3_i32 = arith.constant 3 : i32
    %52 = arith.cmpi eq, %arg1, %c3_i32 : i32
    %53 = arith.extui %52 : i1 to i32
    %c0_i32_37 = arith.constant 0 : i32
    %54 = arith.cmpi ne, %53, %c0_i32_37 : i32
    scf.if %54 {
      %c0_38 = arith.constant 0 : index
      %c0_39 = arith.constant 0 : index
      %c0_40 = arith.constant 0 : index
      %55 = vector.load %arg11[%c0_38, %c0_39, %c0_40] : memref<2x8x32xf32, #tpu.memory_space<vmem>>, vector<2x8x32xf32>
      %c0_41 = arith.constant 0 : index
      %c0_42 = arith.constant 0 : index
      %c0_43 = arith.constant 0 : index
      %56 = vector.load %arg10[%c0_41, %c0_42, %c0_43] : memref<2x8x32xf32, #tpu.memory_space<vmem>>, vector<2x8x32xf32>
      tpu.vector_store %arg10[%c0_41, %c0_42, %c0_43], %55 {strides = array<i32>} : memref<2x8x32xf32, #tpu.memory_space<vmem>>, vector<2x8x32xf32>,
    } else {
    }
    return
  }
  func.func @transform_0(%arg0: i32, %arg1: i32, %arg2: memref<2xi32, #tpu.memory_space<smem>>) -> (i32, i32, i32) {
    %c0_i32 = arith.constant 0 : i32
    %c0_i32_0 = arith.constant 0 : i32
    %c0_i32_1 = arith.constant 0 : i32
    return %arg0, %c0_i32, %c0_i32_0 : i32, i32, i32
  }
  func.func @transform_1(%arg0: i32, %arg1: i32, %arg2: memref<2xi32, #tpu.memory_space<smem>>) -> (i32, i32, i32) {
    %c0_i32 = arith.constant 0 : i32
    %c0_i32_0 = arith.constant 0 : i32
    %c0_i32_1 = arith.constant 0 : i32
    return %arg0, %c0_i32, %c0_i32_0 : i32, i32, i32
  }
  func.func @transform_2(%arg0: i32, %arg1: i32, %arg2: memref<2xi32, #tpu.memory_space<smem>>) -> (i32, i32, i32) {
    %c0_i32 = arith.constant 0 : i32
    %c0_i32_0 = arith.constant 0 : i32
    %c0_i32_1 = arith.constant 0 : i32
    return %arg0, %c0_i32, %c0_i32_0 : i32, i32, i32
  }
  func.func @transform_3(%arg0: i32, %arg1: i32, %arg2: memref<2xi32, #tpu.memory_space<smem>>) -> (i32, i32, i32) {
    %c0_i32 = arith.constant 0 : i32
    %c0_i32_0 = arith.constant 0 : i32
    %c0_i32_1 = arith.constant 0 : i32
    return %arg1, %c0_i32, %c0_i32_0 : i32, i32, i32
  }
  func.func @transform_4(%arg0: i32, %arg1: i32, %arg2: memref<2xi32, #tpu.memory_space<smem>>) -> (i32, i32, i32) {
    %c0_i32 = arith.constant 0 : i32
    %c0_i32_0 = arith.constant 0 : i32
    %c0_i32_1 = arith.constant 0 : i32
    return %arg1, %c0_i32, %c0_i32_0 : i32, i32, i32
  }
  func.func @transform_5(%arg0: i32, %arg1: i32, %arg2: memref<2xi32, #tpu.memory_space<smem>>) -> (i32, i32, i32) {
    %c0_i32 = arith.constant 0 : i32
    %c0_i32_0 = arith.constant 0 : i32
    %c0_i32_1 = arith.constant 0 : i32
    return %arg1, %c0_i32, %c0_i32_0 : i32, i32, i32
  }
  func.func @transform_6(%arg0: i32, %arg1: i32, %arg2: memref<2xi32, #tpu.memory_space<smem>>) -> (i32, i32, i32) {
    %c0_i32 = arith.constant 0 : i32
    %c0_i32_0 = arith.constant 0 : i32
    %c0_i32_1 = arith.constant 0 : i32
    return %arg1, %c0_i32, %c0_i32_0 : i32, i32, i32
  }
  func.func @transform_7(%arg0: i32, %arg1: i32, %arg2: memref<2xi32, #tpu.memory_space<smem>>) -> (i32, i32, i32) {
    %c0_i32 = arith.constant 0 : i32
    %c0_i32_0 = arith.constant 0 : i32
    %c0_i32_1 = arith.constant 0 : i32
    return %arg0, %c0_i32, %c0_i32_0 : i32, i32, i32
  }
}

</mosaic_0001>

<llo_original>
// kernel: tpu_custom_call.1
$region0: #{tpu_custom_call.1}
  #allocation0 [shape = 'u32[]', space=smem, size = 0x4, offset = 0x4, fixed_abs, tag = 'smem constant byte address 0x4 - core index']
  #allocation1 [shape = 'u32[144,128]{1,0:T(1,128)}', space=vmem, size = 0x12000, scoped, tag = 'internal scratch']
  #allocation2 [shape = 'f32[2,8,32]{2,1,0:T(8,128)}', space=vmem, size = 0x2000, scoped, tag = 'scratch operand']
  #allocation3 [shape = 'f32[2,1,8]{2,1,0:T(1,128)}', space=vmem, size = 0x400, scoped, tag = 'scratch operand']
  #allocation4 [shape = 's32[1]{0}', space=sflag, size = 0x4, scoped, tag = 'scoped memory for tpu_custom_call.1']
  #allocation5 [shape = 'u8[512]{0}', space=smem, size = 0x200, scoped, tag = 'prefetched SMEM operand 0']
  %s0 = inlined_call_operand.vmem [shape: s32[2], index: 0, kind: input, shape index: {}]
  %s1 = inlined_call_operand.vmem [shape: f32[2,8,32], index: 1, kind: input, shape index: {}]
  %s2 = inlined_call_operand.vmem [shape: f32[2,8,32], index: 2, kind: input, shape index: {}]
  %s3 = inlined_call_operand.vmem [shape: f32[2,8,32], index: 3, kind: input, shape index: {}]
  %s4 = inlined_call_operand.vmem [shape: bf16[4,32,8], index: 4, kind: input, shape index: {}]
  %s5 = inlined_call_operand.vmem [shape: bf16[4,32,8], index: 5, kind: input, shape index: {}]
  %s6 = inlined_call_operand.vmem [shape: bf16[4,32,8], index: 6, kind: input, shape index: {}]
  %s7 = inlined_call_operand.vmem [shape: bf16[4,8,32], index: 7, kind: input, shape index: {}]
  %s8 = inlined_call_operand.hbm [shape: f32[2,8,32], index: 8, kind: output, shape index: {}]
  %s9 = sld [smem:[#allocation0]]
  $region69: #{tpu_custom_call.1} parent=0
    _
  %s11 = ssub.s32 1, %s9
  %s12 = scalar_select 0, %s11, %s9
  %s13 = sshll.u32 %s0, 4
  %s14 = int_to_ptr.vmem [resolvable:$true] %s13
  %16 = dma.vmem_to_smem %s14, 16, [#allocation5], [#allocation4]
  %17 = dma.done [#allocation4], 16
  %18 = sfence
  $region1: #{tpu_custom_call.1} parent=0
    #allocation6 [shape = 'u8[8192]{0}', space=vmem, size = 0x2000, scoped, tag = 'output window, operand 0, single buffered']
    #allocation7 [shape = 's32[2]{0}', space=sflag, size = 0x8, scoped, tag = 'scoped memory for tpu_custom_call.1']
    %19 = vsyncpa [#allocation7], 0
    loop: start=0, step=1, limit=6
    $region2: #{tpu_custom_call.1} parent=1 // loop_pre_header
      _
    $region3: #{tpu_custom_call.1} parent=1 // loop_header
      %s21 = sphi 0, %s25
      %p22 = scmp.ge.s32.totalorder %s21, 6
      %s28 = sphi 0, %s40
      %s29 = sphi 0, %s36
      %s30 = sphi 0, %s28
      %s31 = sphi 0, %s29
      %s32 = sphi 0, %s30
      %s33 = sphi 0, %s31
      %s43 = sphi 0, %s45
      %s46 = sphi 0, %s43
      %s47 = sphi 0, %s46
      %s63 = sphi 0, %s47
      %s69 = sphi 0, %s71
      %s72 = sphi 0, %s69
      %s73 = sphi 0, %s72
      %s89 = sphi 0, %s73
      %s95 = sphi 0, %s97
      %s98 = sphi 0, %s95
      %s99 = sphi 0, %s98
      %s115 = sphi 0, %s99
      %s121 = sphi 0, %s123
      %s124 = sphi 0, %s121
      %s125 = sphi 0, %s124
      %s141 = sphi 0, %s125
      %s147 = sphi 0, %s149
      %s150 = sphi 0, %s147
      %s151 = sphi 0, %s150
      %s167 = sphi 0, %s151
      %s173 = sphi 0, %s175
      %s176 = sphi 0, %s173
      %s177 = sphi 0, %s176
      %s193 = sphi 0, %s177
      %s199 = sphi 0, %s201
      %s202 = sphi 0, %s199
      %s203 = sphi 0, %s202
      %s219 = sphi 0, %s203
      %s225 = sphi 0, %s227
      %s228 = sphi 0, %s225
      %s229 = sphi 0, %s228
      %s245 = sphi 0, %s229
    $region4: #{tpu_custom_call.1} parent=1 // loop_header_branch
      %24 = sbr.rel (%p22) target = $region8
    $region5: #{tpu_custom_call.1} parent=1 // loop_body
      %s26 = ssub.s32 %s21, 1
      %s27 = ssub.s32 %s21, 2
      %s34 = sadd.s32 1, %s29
      %p35 = scmp.ge.s32.totalorder %s34, 4
      %s36 = scalar_select %p35, 0, %s34
      %s37 = sadd.s32 1, %s28
      %s38 = scalar_select %p35, %s37, %s28
      %p39 = scmp.ge.s32.totalorder %s38, 1
      %s40 = scalar_select %p39, 0, %s38
      %s41 = ssub.s32 %s28, %s40
      %p42 = scmp.eq.s32.totalorder %s41, 0
      %s44 = sadd.s32 %s43, 1
      %s45 = scalar_select %p42, %s43, %s44
      %p48 = pneg %p42
      %p49 = scmp.eq.s32.totalorder %s21, 3
      %p50 = por %p48, %p49
      %p51 = scmp.ne.s32.totalorder %s43, %s46
      %p52 = scmp.eq.s32.totalorder %s21, 0
      %p53 = por %p51, %p52
      %p54 = scmp.ne.s32.totalorder %s43, %s46
      %p55 = scmp.eq.s32.totalorder %s26, 3
      %p56 = por %p54, %p55
      %p57 = scmp.ne.s32.totalorder %s46, %s47
      %p58 = scmp.eq.s32.totalorder %s26, 0
      %p59 = por %p57, %p58
      %p60 = scmp.ne.s32.totalorder %s46, %s47
      %p61 = scmp.eq.s32.totalorder %s27, 3
      %p62 = por %p60, %p61
      %p64 = scmp.ne.s32.totalorder %s47, %s63
      %p65 = scmp.eq.s32.totalorder %s27, 0
      %p66 = por %p64, %p65
      %s67 = ssub.s32 %s28, %s40
      %p68 = scmp.eq.s32.totalorder %s67, 0
      %s70 = sadd.s32 %s69, 1
      %s71 = scalar_select %p68, %s69, %s70
      %p74 = pneg %p68
      %p75 = scmp.eq.s32.totalorder %s21, 3
      %p76 = por %p74, %p75
      %p77 = scmp.ne.s32.totalorder %s69, %s72
      %p78 = scmp.eq.s32.totalorder %s21, 0
      %p79 = por %p77, %p78
      %p80 = scmp.ne.s32.totalorder %s69, %s72
      %p81 = scmp.eq.s32.totalorder %s26, 3
      %p82 = por %p80, %p81
      %p83 = scmp.ne.s32.totalorder %s72, %s73
      %p84 = scmp.eq.s32.totalorder %s26, 0
      %p85 = por %p83, %p84
      %p86 = scmp.ne.s32.totalorder %s72, %s73
      %p87 = scmp.eq.s32.totalorder %s27, 3
      %p88 = por %p86, %p87
      %p90 = scmp.ne.s32.totalorder %s73, %s89
      %p91 = scmp.eq.s32.totalorder %s27, 0
      %p92 = por %p90, %p91
      %s93 = ssub.s32 %s28, %s40
      %p94 = scmp.eq.s32.totalorder %s93, 0
      %s96 = sadd.s32 %s95, 1
      %s97 = scalar_select %p94, %s95, %s96
      %p100 = pneg %p94
      %p101 = scmp.eq.s32.totalorder %s21, 3
      %p102 = por %p100, %p101
      %p103 = scmp.ne.s32.totalorder %s95, %s98
      %p104 = scmp.eq.s32.totalorder %s21, 0
      %p105 = por %p103, %p104
      %p106 = scmp.ne.s32.totalorder %s95, %s98
      %p107 = scmp.eq.s32.totalorder %s26, 3
      %p108 = por %p106, %p107
      %p109 = scmp.ne.s32.totalorder %s98, %s99
      %p110 = scmp.eq.s32.totalorder %s26, 0
      %p111 = por %p109, %p110
      %p112 = scmp.ne.s32.totalorder %s98, %s99
      %p113 = scmp.eq.s32.totalorder %s27, 3
      %p114 = por %p112, %p113
      %p116 = scmp.ne.s32.totalorder %s99, %s115
      %p117 = scmp.eq.s32.totalorder %s27, 0
      %p118 = por %p116, %p117
      %s119 = ssub.s32 %s29, %s36
      %p120 = scmp.eq.s32.totalorder %s119, 0
      %s122 = sadd.s32 %s121, 1
      %s123 = scalar_select %p120, %s121, %s122
      %p126 = pneg %p120
      %p127 = scmp.eq.s32.totalorder %s21, 3
      %p128 = por %p126, %p127
      %p129 = scmp.ne.s32.totalorder %s121, %s124
      %p130 = scmp.eq.s32.totalorder %s21, 0
      %p131 = por %p129, %p130
      %p132 = scmp.ne.s32.totalorder %s121, %s124
      %p133 = scmp.eq.s32.totalorder %s26, 3
      %p134 = por %p132, %p133
      %p135 = scmp.ne.s32.totalorder %s124, %s125
      %p136 = scmp.eq.s32.totalorder %s26, 0
      %p137 = por %p135, %p136
      %p138 = scmp.ne.s32.totalorder %s124, %s125
      %p139 = scmp.eq.s32.totalorder %s27, 3
      %p140 = por %p138, %p139
      %p142 = scmp.ne.s32.totalorder %s125, %s141
      %p143 = scmp.eq.s32.totalorder %s27, 0
      %p144 = por %p142, %p143
      %s145 = ssub.s32 %s29, %s36
      %p146 = scmp.eq.s32.totalorder %s145, 0
      %s148 = sadd.s32 %s147, 1
      %s149 = scalar_select %p146, %s147, %s148
      %p152 = pneg %p146
      %p153 = scmp.eq.s32.totalorder %s21, 3
      %p154 = por %p152, %p153
      %p155 = scmp.ne.s32.totalorder %s147, %s150
      %p156 = scmp.eq.s32.totalorder %s21, 0
      %p157 = por %p155, %p156
      %p158 = scmp.ne.s32.totalorder %s147, %s150
      %p159 = scmp.eq.s32.totalorder %s26, 3
      %p160 = por %p158, %p159
      %p161 = scmp.ne.s32.totalorder %s150, %s151
      %p162 = scmp.eq.s32.totalorder %s26, 0
      %p163 = por %p161, %p162
      %p164 = scmp.ne.s32.totalorder %s150, %s151
      %p165 = scmp.eq.s32.totalorder %s27, 3
      %p166 = por %p164, %p165
      %p168 = scmp.ne.s32.totalorder %s151, %s167
      %p169 = scmp.eq.s32.totalorder %s27, 0
      %p170 = por %p168, %p169
      %s171 = ssub.s32 %s29, %s36
      %p172 = scmp.eq.s32.totalorder %s171, 0
      %s174 = sadd.s32 %s173, 1
      %s175 = scalar_select %p172, %s173, %s174
      %p178 = pneg %p172
      %p179 = scmp.eq.s32.totalorder %s21, 3
      %p180 = por %p178, %p179
      %p181 = scmp.ne.s32.totalorder %s173, %s176
      %p182 = scmp.eq.s32.totalorder %s21, 0
      %p183 = por %p181, %p182
      %p184 = scmp.ne.s32.totalorder %s173, %s176
      %p185 = scmp.eq.s32.totalorder %s26, 3
      %p186 = por %p184, %p185
      %p187 = scmp.ne.s32.totalorder %s176, %s177
      %p188 = scmp.eq.s32.totalorder %s26, 0
      %p189 = por %p187, %p188
      %p190 = scmp.ne.s32.totalorder %s176, %s177
      %p191 = scmp.eq.s32.totalorder %s27, 3
      %p192 = por %p190, %p191
      %p194 = scmp.ne.s32.totalorder %s177, %s193
      %p195 = scmp.eq.s32.totalorder %s27, 0
      %p196 = por %p194, %p195
      %s197 = ssub.s32 %s29, %s36
      %p198 = scmp.eq.s32.totalorder %s197, 0
      %s200 = sadd.s32 %s199, 1
      %s201 = scalar_select %p198, %s199, %s200
      %p204 = pneg %p198
      %p205 = scmp.eq.s32.totalorder %s21, 3
      %p206 = por %p204, %p205
      %p207 = scmp.ne.s32.totalorder %s199, %s202
      %p208 = scmp.eq.s32.totalorder %s21, 0
      %p209 = por %p207, %p208
      %p210 = scmp.ne.s32.totalorder %s199, %s202
      %p211 = scmp.eq.s32.totalorder %s26, 3
      %p212 = por %p210, %p211
      %p213 = scmp.ne.s32.totalorder %s202, %s203
      %p214 = scmp.eq.s32.totalorder %s26, 0
      %p215 = por %p213, %p214
      %p216 = scmp.ne.s32.totalorder %s202, %s203
      %p217 = scmp.eq.s32.totalorder %s27, 3
      %p218 = por %p216, %p217
      %p220 = scmp.ne.s32.totalorder %s203, %s219
      %p221 = scmp.eq.s32.totalorder %s27, 0
      %p222 = por %p220, %p221
      %s223 = ssub.s32 %s28, %s40
      %p224 = scmp.eq.s32.totalorder %s223, 0
      %s226 = sadd.s32 %s225, 1
      %s227 = scalar_select %p224, %s225, %s226
      %p230 = pneg %p224
      %p231 = scmp.eq.s32.totalorder %s21, 3
      %p232 = por %p230, %p231
      %p233 = scmp.ne.s32.totalorder %s225, %s228
      %p234 = scmp.eq.s32.totalorder %s21, 0
      %p235 = por %p233, %p234
      %p236 = scmp.ne.s32.totalorder %s225, %s228
      %p237 = scmp.eq.s32.totalorder %s26, 3
      %p238 = por %p236, %p237
      %p239 = scmp.ne.s32.totalorder %s228, %s229
      %p240 = scmp.eq.s32.totalorder %s26, 0
      %p241 = por %p239, %p240
      %p242 = scmp.ne.s32.totalorder %s228, %s229
      %p243 = scmp.eq.s32.totalorder %s27, 3
      %p244 = por %p242, %p243
      %p246 = scmp.ne.s32.totalorder %s229, %s245
      %p247 = scmp.eq.s32.totalorder %s27, 0
      %p248 = por %p246, %p247
      %p249 = scmp.le.s32.totalorder 1, %s21
      %p250 = scmp.lt.s32.totalorder %s21, 5
      %p251 = pnand %p249, %p250
      %p252 = pneg %p251
      // Predicated region
      $region9: #{tpu_custom_call.1} parent=5 // pred_check
        _
      $region10: #{tpu_custom_call.1} parent=5 // pred_check_branch
        %254 = sbr.rel (%p251) target = $region12
      $region11: #{tpu_custom_call.1} parent=5 // pred_region
        %s255 = ssub.s32 %s21, 1
        // Predicated region
        $region13: #{tpu_custom_call.1} parent=11 // pred_check
          %p256 = pneg %p59
        $region14: #{tpu_custom_call.1} parent=11 // pred_check_branch
          %258 = sbr.rel (%p256) target = $region16
        $region15: #{tpu_custom_call.1} parent=11 // pred_region
          %s259 = smul.u32 2, %s30
          %p260 = scmp.lt.s32.totalorder %s259, 1
          %s261 = scalar_select %p260, %s259, 1
          %s262 = smul.addr %s261, 8
          %s263 = scalar_lea.vmem %s1, %s262
          %s264 = smul.u32 2, %s30
        $region16: #{tpu_custom_call.1} parent=11 // pred_fallthru
          _
        // Predicated region
        $region17: #{tpu_custom_call.1} parent=11 // pred_check
          %p265 = pneg %p85
        $region18: #{tpu_custom_call.1} parent=11 // pred_check_branch
          %267 = sbr.rel (%p265) target = $region20
        $region19: #{tpu_custom_call.1} parent=11 // pred_region
          %s268 = smul.u32 2, %s30
          %p269 = scmp.lt.s32.totalorder %s268, 1
          %s270 = scalar_select %p269, %s268, 1
          %s271 = smul.addr %s270, 8
          %s272 = scalar_lea.vmem %s2, %s271
          %s273 = smul.u32 2, %s30
        $region20: #{tpu_custom_call.1} parent=11 // pred_fallthru
          _
        // Predicated region
        $region21: #{tpu_custom_call.1} parent=11 // pred_check
          %p274 = pneg %p111
        $region22: #{tpu_custom_call.1} parent=11 // pred_check_branch
          %276 = sbr.rel (%p274) target = $region24
        $region23: #{tpu_custom_call.1} parent=11 // pred_region
          %s277 = smul.u32 2, %s30
          %p278 = scmp.lt.s32.totalorder %s277, 1
          %s279 = scalar_select %p278, %s277, 1
          %s280 = smul.addr %s279, 8
          %s281 = scalar_lea.vmem %s3, %s280
          %s282 = smul.u32 2, %s30
        $region24: #{tpu_custom_call.1} parent=11 // pred_fallthru
          _
      $region12: #{tpu_custom_call.1} parent=5 // pred_fallthru
        _
      %p283 = scmp.lt.s32.totalorder %s21, 4
      // Predicated region
      $region25: #{tpu_custom_call.1} parent=5 // pred_check
        %p284 = pneg %p283
      $region26: #{tpu_custom_call.1} parent=5 // pred_check_branch
        %286 = sbr.rel (%p284) target = $region28
      $region27: #{tpu_custom_call.1} parent=5 // pred_region
        // Predicated region
        $region29: #{tpu_custom_call.1} parent=27 // pred_check
          %p287 = pneg %p131
        $region30: #{tpu_custom_call.1} parent=27 // pred_check_branch
          %289 = sbr.rel (%p287) target = $region32
        $region31: #{tpu_custom_call.1} parent=27 // pred_region
          %p290 = scmp.lt.s32.totalorder %s29, 3
          %s291 = scalar_select %p290, %s29, 3
          %s292 = smul.addr %s291, 4
          %s293 = smul.addr %s292, 4
          %s294 = scalar_lea.vmem %s4, %s293
        $region32: #{tpu_custom_call.1} parent=27 // pred_fallthru
          _
        // Predicated region
        $region33: #{tpu_custom_call.1} parent=27 // pred_check
          %p295 = pneg %p157
        $region34: #{tpu_custom_call.1} parent=27 // pred_check_branch
          %297 = sbr.rel (%p295) target = $region36
        $region35: #{tpu_custom_call.1} parent=27 // pred_region
          %p298 = scmp.lt.s32.totalorder %s29, 3
          %s299 = scalar_select %p298, %s29, 3
          %s300 = smul.addr %s299, 4
          %s301 = smul.addr %s300, 4
          %s302 = scalar_lea.vmem %s5, %s301
        $region36: #{tpu_custom_call.1} parent=27 // pred_fallthru
          _
        // Predicated region
        $region37: #{tpu_custom_call.1} parent=27 // pred_check
          %p303 = pneg %p183
        $region38: #{tpu_custom_call.1} parent=27 // pred_check_branch
          %305 = sbr.rel (%p303) target = $region40
        $region39: #{tpu_custom_call.1} parent=27 // pred_region
          %p306 = scmp.lt.s32.totalorder %s29, 3
          %s307 = scalar_select %p306, %s29, 3
          %s308 = smul.addr %s307, 4
          %s309 = smul.addr %s308, 4
          %s310 = scalar_lea.vmem %s6, %s309
        $region40: #{tpu_custom_call.1} parent=27 // pred_fallthru
          _
        // Predicated region
        $region41: #{tpu_custom_call.1} parent=27 // pred_check
          %p311 = pneg %p209
        $region42: #{tpu_custom_call.1} parent=27 // pred_check_branch
          %313 = sbr.rel (%p311) target = $region44
        $region43: #{tpu_custom_call.1} parent=27 // pred_region
          %p314 = scmp.lt.s32.totalorder %s29, 3
          %s315 = scalar_select %p314, %s29, 3
          %s316 = smul.addr %s315, 4
          %s317 = scalar_lea.vmem %s7, %s316
        $region44: #{tpu_custom_call.1} parent=27 // pred_fallthru
          _
      $region28: #{tpu_custom_call.1} parent=5 // pred_fallthru
        _
      %p318 = scmp.le.s32.totalorder 1, %s21
      %p319 = scmp.lt.s32.totalorder %s21, 5
      %p320 = pnand %p318, %p319
      %p321 = pneg %p320
      // Predicated region
      $region45: #{tpu_custom_call.1} parent=5 // pred_check
        _
      $region46: #{tpu_custom_call.1} parent=5 // pred_check_branch
        %323 = sbr.rel (%p320) target = $region48
      $region47: #{tpu_custom_call.1} parent=5 // pred_region
        %s324 = ssub.s32 %s21, 1
        %s325 = smul.u32 2, %s30
        %p326 = scmp.lt.s32.totalorder %s325, 1
        %s327 = scalar_select %p326, %s325, 1
        %s328 = smul.addr %s327, 8
        %s329 = scalar_lea.vmem %s1, %s328
        %p330 = pneg %p59
        %p331 = pneg %p56
        %s332 = smul.u32 2, %s30
        %p333 = scmp.lt.s32.totalorder %s332, 1
        %s334 = scalar_select %p333, %s332, 1
        %s335 = smul.addr %s334, 8
        %s336 = scalar_lea.vmem %s2, %s335
        %p337 = pneg %p85
        %p338 = pneg %p82
        %s339 = smul.u32 2, %s30
        %p340 = scmp.lt.s32.totalorder %s339, 1
        %s341 = scalar_select %p340, %s339, 1
        %s342 = smul.addr %s341, 8
        %s343 = scalar_lea.vmem %s3, %s342
        %p344 = pneg %p111
        %p345 = pneg %p108
        %p346 = scmp.lt.s32.totalorder %s31, 3
        %s347 = scalar_select %p346, %s31, 3
        %s348 = smul.addr %s347, 4
        %s349 = smul.addr %s348, 4
        %s350 = scalar_lea.vmem %s4, %s349
        %p351 = pneg %p137
        %p352 = pneg %p134
        %p353 = scmp.lt.s32.totalorder %s31, 3
        %s354 = scalar_select %p353, %s31, 3
        %s355 = smul.addr %s354, 4
        %s356 = smul.addr %s355, 4
        %s357 = scalar_lea.vmem %s5, %s356
        %p358 = pneg %p163
        %p359 = pneg %p160
        %p360 = scmp.lt.s32.totalorder %s31, 3
        %s361 = scalar_select %p360, %s31, 3
        %s362 = smul.addr %s361, 4
        %s363 = smul.addr %s362, 4
        %s364 = scalar_lea.vmem %s6, %s363
        %p365 = pneg %p189
        %p366 = pneg %p186
        %p367 = scmp.lt.s32.totalorder %s31, 3
        %s368 = scalar_select %p367, %s31, 3
        %s369 = smul.addr %s368, 4
        %s370 = scalar_lea.vmem %s7, %s369
        %p371 = pneg %p215
        %p372 = pneg %p212
        %p373 = pneg %p241
        %p374 = pneg %p238
        %s375 = smul.u32 2, %s30
        %p376 = scmp.lt.s32.totalorder %s375, 1
        %s377 = scalar_select %p376, %s375, 1
        %s378 = smul.addr %s377, 8
        %s379 = scalar_lea.vmem %s1, %s378
        %s380 = smul.u32 2, %s30
        %s381 = smul.u32 2, %s30
        %p382 = scmp.lt.s32.totalorder %s381, 1
        %s383 = scalar_select %p382, %s381, 1
        %s384 = smul.addr %s383, 8
        %s385 = scalar_lea.vmem %s2, %s384
        %s386 = smul.u32 2, %s30
        %s387 = smul.u32 2, %s30
        %p388 = scmp.lt.s32.totalorder %s387, 1
        %s389 = scalar_select %p388, %s387, 1
        %s390 = smul.addr %s389, 8
        %s391 = scalar_lea.vmem %s3, %s390
        %s392 = smul.u32 2, %s30
        %p393 = scmp.lt.s32.totalorder %s31, 3
        %s394 = scalar_select %p393, %s31, 3
        %s395 = smul.addr %s394, 4
        %s396 = smul.addr %s395, 4
        %s397 = scalar_lea.vmem %s4, %s396
        %p398 = scmp.lt.s32.totalorder %s31, 3
        %s399 = scalar_select %p398, %s31, 3
        %s400 = smul.addr %s399, 4
        %s401 = smul.addr %s400, 4
        %s402 = scalar_lea.vmem %s5, %s401
        %p403 = scmp.lt.s32.totalorder %s31, 3
        %s404 = scalar_select %p403, %s31, 3
        %s405 = smul.addr %s404, 4
        %s406 = smul.addr %s405, 4
        %s407 = scalar_lea.vmem %s6, %s406
        %p408 = scmp.lt.s32.totalorder %s31, 3
        %s409 = scalar_select %p408, %s31, 3
        %s410 = smul.addr %s409, 4
        %s411 = scalar_lea.vmem %s7, %s410
        %s412 = smul.u32 2, %s30
        %p414 = scmp.eq.s32.totalorder %s31, 0
        // Predicated region
        $region49: #{tpu_custom_call.1} parent=47 // pred_check
          %p415 = pneg %p414
        $region50: #{tpu_custom_call.1} parent=47 // pred_check_branch
          %417 = sbr.rel (%p415) target = $region52
        $region51: #{tpu_custom_call.1} parent=47 // pred_region
          %vm418 = vcmask 261120
          %419 = vst.msk [vmem:[#allocation2] sm:$0xff] %vm418, 0.0
          %420 = vst.msk [vmem:[#allocation2 + $0x8] sm:$0xff] %vm418, 0.0
          %v421 = vlaneseq
          %v422 = vand.u32 %v421, 127
          %s423 = smul.u32 %s30, 2
          %s424 = sld [smem:[#allocation5 + %s423]]
          %v425 = vstv %s424
          %vm426 = vcmp.lt.s32.totalorder %v422, %v425
          %v427 = vsel %vm426, 0.0, -1000000.0
          %vm428 = vcmask 57344
          %429 = vst.msk [vmem:[#allocation3] sm:$0x1] %vm428, %v427
          %s430 = sadd.s32 %s423, 1
          %s431 = sld [smem:[#allocation5 + %s430]]
          %v432 = vstv %s431
          %vm433 = vcmp.lt.s32.totalorder %v422, %v432
          %v434 = vsel %vm433, 0.0, -1000000.0
          %s435 = scalar_lea.vmem [#allocation3], 1
          %436 = vst.msk [vmem:[%s435] sm:$0x1] %vm428, %v434
        $region52: #{tpu_custom_call.1} parent=47 // pred_fallthru
          _
        %v437 = vld [vmem:[%s379] sm:$0xff]
        %v438 = vld [vmem:[%s379 + $0x8] sm:$0xff]
        %v439 = vpack.c.bf16 %v438, %v437
        %v440 = vld [vmem:[%s385] sm:$0xff]
        %v441 = vld [vmem:[%s385 + $0x8] sm:$0xff]
        %v442 = vpack.c.bf16 %v441, %v440
        %v443 = vld [vmem:[%s391] sm:$0xff]
        %v444 = vld [vmem:[%s391 + $0x8] sm:$0xff]
        %v445 = vpack.c.bf16 %v444, %v443
        %v446 = vld [vmem:[%s397] sm:$0xf]
        %v447 = vld [vmem:[%s397 + $0x4] sm:$0xf]
        %v448 = vld [vmem:[%s397 + $0x8] sm:$0xf]
        %v449 = vld [vmem:[%s397 + $0xc] sm:$0xf]
        %v454 = vunpack.c.l.b16 %v446
        %v455 = vunpack.c.l.b16 %v447
        %v456 = vunpack.c.l.b16 %v448
        %v457 = vunpack.c.l.b16 %v449
        %v458 = vpack.c.b16 %v455, %v454
        %v459 = vpack.c.b16 %v457, %v456
        %vm462 = vcmask 261120
        %v464 = vsel %vm462, %v439, 0
        %466 = vmatprep.subr.bf16.mxu0 0
        %467 = vmatpush1.bf16.msra.mxu0 %v458
        %468 = vmatprep.subr.bf16.mxu0 0
        %469 = vmatpush1.bf16.msra.mxu0 %v459
        %470 = vmatprep.subr.bf16.mxu0 0
        %471 = vmatpush1.bf16.msra.mxu0 0
        %472 = vmatprep.subr.bf16.mxu0 0
        %473 = vmatpush1.bf16.msra.mxu0 0
        %474 = vmatprep.subr.bf16.mxu0 0
        %475 = vmatpush1.bf16.msra.mxu0 0
        %476 = vmatprep.subr.bf16.mxu0 0
        %477 = vmatpush1.bf16.msra.mxu0 0
        %478 = vmatprep.subr.bf16.mxu0 0
        %479 = vmatpush1.bf16.msra.mxu0 0
        %480 = vmatprep.subr.bf16.mxu0 0
        %481 = vmatpush1.bf16.msra.mxu0 0
        %482 = vmatprep.subr.bf16.mxu0 0
        %483 = vmatpush1.bf16.msra.mxu0 0
        %484 = vmatprep.subr.bf16.mxu0 0
        %485 = vmatpush1.bf16.msra.mxu0 0
        %486 = vmatprep.subr.bf16.mxu0 0
        %487 = vmatpush1.bf16.msra.mxu0 0
        %488 = vmatprep.subr.bf16.mxu0 0
        %489 = vmatpush1.bf16.msra.mxu0 0
        %490 = vmatprep.subr.bf16.mxu0 0
        %491 = vmatpush1.bf16.msra.mxu0 0
        %492 = vmatprep.subr.bf16.mxu0 0
        %493 = vmatpush1.bf16.msra.mxu0 0
        %494 = vmatprep.subr.bf16.mxu0 0
        %495 = vmatpush1.bf16.msra.mxu0 0
        %496 = vmatprep.subr.bf16.mxu0 0
        %497 = vmatpush1.bf16.msra.mxu0 0
        %498 = vmatprep.mubr.bf16.mxu0 0
        %499 = vmatmul.mubr.bf16.gmra.mrb[0].mxu0 %v464
        %v500 = vpop.f32.mrb[0].mxu0
        %v501 = vadd.f32 0.0, %v500
        %v502 = vpop.f32.mrb[0].mxu0
        %v503 = vpop.f32.mrb[0].mxu0
        %v504 = vadd.f32 0.0, %v503
        %v505 = vpop.f32.mrb[0].mxu0
        %506 = vdwg.mxu0
        %v507 = vld [vmem:[%s402] sm:$0xf]
        %v508 = vld [vmem:[%s402 + $0x4] sm:$0xf]
        %v509 = vld [vmem:[%s402 + $0x8] sm:$0xf]
        %v510 = vld [vmem:[%s402 + $0xc] sm:$0xf]
        %v515 = vunpack.c.l.b16 %v507
        %v516 = vunpack.c.l.b16 %v508
        %v517 = vunpack.c.l.b16 %v509
        %v518 = vunpack.c.l.b16 %v510
        %v519 = vpack.c.b16 %v516, %v515
        %v520 = vpack.c.b16 %v518, %v517
        %v524 = vsel %vm462, %v442, 0
        %526 = vmatprep.subr.bf16.mxu0 0
        %527 = vmatpush1.bf16.msra.mxu0 %v519
        %528 = vmatprep.subr.bf16.mxu0 0
        %529 = vmatpush1.bf16.msra.mxu0 %v520
        %530 = vmatprep.subr.bf16.mxu0 0
        %531 = vmatpush1.bf16.msra.mxu0 0
        %532 = vmatprep.subr.bf16.mxu0 0
        %533 = vmatpush1.bf16.msra.mxu0 0
        %534 = vmatprep.subr.bf16.mxu0 0
        %535 = vmatpush1.bf16.msra.mxu0 0
        %536 = vmatprep.subr.bf16.mxu0 0
        %537 = vmatpush1.bf16.msra.mxu0 0
        %538 = vmatprep.subr.bf16.mxu0 0
        %539 = vmatpush1.bf16.msra.mxu0 0
        %540 = vmatprep.subr.bf16.mxu0 0
        %541 = vmatpush1.bf16.msra.mxu0 0
        %542 = vmatprep.subr.bf16.mxu0 0
        %543 = vmatpush1.bf16.msra.mxu0 0
        %544 = vmatprep.subr.bf16.mxu0 0
        %545 = vmatpush1.bf16.msra.mxu0 0
        %546 = vmatprep.subr.bf16.mxu0 0
        %547 = vmatpush1.bf16.msra.mxu0 0
        %548 = vmatprep.subr.bf16.mxu0 0
        %549 = vmatpush1.bf16.msra.mxu0 0
        %550 = vmatprep.subr.bf16.mxu0 0
        %551 = vmatpush1.bf16.msra.mxu0 0
        %552 = vmatprep.subr.bf16.mxu0 0
        %553 = vmatpush1.bf16.msra.mxu0 0
        %554 = vmatprep.subr.bf16.mxu0 0
        %555 = vmatpush1.bf16.msra.mxu0 0
        %556 = vmatprep.subr.bf16.mxu0 0
        %557 = vmatpush1.bf16.msra.mxu0 0
        %558 = vmatprep.mubr.bf16.mxu0 0
        %559 = vmatmul.mubr.bf16.gmra.mrb[0].mxu0 %v524
        %v560 = vpop.f32.mrb[0].mxu0
        %v561 = vadd.f32 0.0, %v560
        %v562 = vpop.f32.mrb[0].mxu0
        %v563 = vpop.f32.mrb[0].mxu0
        %v564 = vadd.f32 0.0, %v563
        %v565 = vpop.f32.mrb[0].mxu0
        %566 = vdwg.mxu0
        %v567 = vld [vmem:[%s407] sm:$0xf]
        %v568 = vld [vmem:[%s407 + $0x4] sm:$0xf]
        %v569 = vld [vmem:[%s407 + $0x8] sm:$0xf]
        %v570 = vld [vmem:[%s407 + $0xc] sm:$0xf]
        %v575 = vunpack.c.l.b16 %v567
        %v576 = vunpack.c.l.b16 %v568
        %v577 = vunpack.c.l.b16 %v569
        %v578 = vunpack.c.l.b16 %v570
        %v579 = vpack.c.b16 %v576, %v575
        %v580 = vpack.c.b16 %v578, %v577
        %v584 = vsel %vm462, %v445, 0
        %586 = vmatprep.subr.bf16.mxu0 0
        %587 = vmatpush1.bf16.msra.mxu0 %v579
        %588 = vmatprep.subr.bf16.mxu0 0
        %589 = vmatpush1.bf16.msra.mxu0 %v580
        %590 = vmatprep.subr.bf16.mxu0 0
        %591 = vmatpush1.bf16.msra.mxu0 0
        %592 = vmatprep.subr.bf16.mxu0 0
        %593 = vmatpush1.bf16.msra.mxu0 0
        %594 = vmatprep.subr.bf16.mxu0 0
        %595 = vmatpush1.bf16.msra.mxu0 0
        %596 = vmatprep.subr.bf16.mxu0 0
        %597 = vmatpush1.bf16.msra.mxu0 0
        %598 = vmatprep.subr.bf16.mxu0 0
        %599 = vmatpush1.bf16.msra.mxu0 0
        %600 = vmatprep.subr.bf16.mxu0 0
        %601 = vmatpush1.bf16.msra.mxu0 0
        %602 = vmatprep.subr.bf16.mxu0 0
        %603 = vmatpush1.bf16.msra.mxu0 0
        %604 = vmatprep.subr.bf16.mxu0 0
        %605 = vmatpush1.bf16.msra.mxu0 0
        %606 = vmatprep.subr.bf16.mxu0 0
        %607 = vmatpush1.bf16.msra.mxu0 0
        %608 = vmatprep.subr.bf16.mxu0 0
        %609 = vmatpush1.bf16.msra.mxu0 0
        %610 = vmatprep.subr.bf16.mxu0 0
        %611 = vmatpush1.bf16.msra.mxu0 0
        %612 = vmatprep.subr.bf16.mxu0 0
        %613 = vmatpush1.bf16.msra.mxu0 0
        %614 = vmatprep.subr.bf16.mxu0 0
        %615 = vmatpush1.bf16.msra.mxu0 0
        %616 = vmatprep.subr.bf16.mxu0 0
        %617 = vmatpush1.bf16.msra.mxu0 0
        %618 = vmatprep.mubr.bf16.mxu0 0
        %619 = vmatmul.mubr.bf16.gmra.mrb[0].mxu0 %v584
        %v620 = vpop.f32.mrb[0].mxu0
        %v621 = vadd.f32 0.0, %v620
        %v622 = vpop.f32.mrb[0].mxu0
        %v623 = vpop.f32.mrb[0].mxu0
        %v624 = vadd.f32 0.0, %v623
        %v625 = vpop.f32.mrb[0].mxu0
        %626 = vdwg.mxu0
        %v627 = vpack.c.bf16 %v501, %v501
        %v628 = vpack.c.bf16 %v504, %v504
        %v629 = vpack.c.bf16 %v561, %v561
        %v630 = vpack.c.bf16 %v564, %v564
        %v631 = vld [vmem:[#allocation3] sm:$0x1]
        %v632 = vld [vmem:[#allocation3 + $0x1] sm:$0x1]
        %v635 = vlaneseq
        %v636 = vshrl.u32 %v635, 7
        %v637 = vsub.s32 0, %v636
        %v638 = vrot.slane %v631, %v637
        %v639 = vlaneseq
        %v640 = vshrl.u32 %v639, 7
        %v641 = vsub.s32 0, %v640
        %v642 = vrot.slane %v632, %v641
        %vm645 = vcmask 64512
        %v647 = vsel %vm645, %v627, 0
        %v650 = vsel %vm645, %v629, 0
        %652 = vmatprep.subr.bf16.mxu0 0
        %653 = vmatpush1.bf16.xpose.msra.mxu0 %v650
        %654 = vmatprep.subr.bf16.mxu0 0
        %655 = vmatpush1.bf16.xpose.msra.mxu0 0
        %656 = vmatprep.subr.bf16.mxu0 0
        %657 = vmatpush1.bf16.xpose.msra.mxu0 0
        %658 = vmatprep.subr.bf16.mxu0 0
        %659 = vmatpush1.bf16.xpose.msra.mxu0 0
        %660 = vmatprep.subr.bf16.mxu0 0
        %661 = vmatpush1.bf16.xpose.msra.mxu0 0
        %662 = vmatprep.subr.bf16.mxu0 0
        %663 = vmatpush1.bf16.xpose.msra.mxu0 0
        %664 = vmatprep.subr.bf16.mxu0 0
        %665 = vmatpush1.bf16.xpose.msra.mxu0 0
        %666 = vmatprep.subr.bf16.mxu0 0
        %667 = vmatpush1.bf16.xpose.msra.mxu0 0
        %668 = vmatprep.subr.bf16.mxu0 0
        %669 = vmatpush1.bf16.xpose.msra.mxu0 0
        %670 = vmatprep.subr.bf16.mxu0 0
        %671 = vmatpush1.bf16.xpose.msra.mxu0 0
        %672 = vmatprep.subr.bf16.mxu0 0
        %673 = vmatpush1.bf16.xpose.msra.mxu0 0
        %674 = vmatprep.subr.bf16.mxu0 0
        %675 = vmatpush1.bf16.xpose.msra.mxu0 0
        %676 = vmatprep.subr.bf16.mxu0 0
        %677 = vmatpush1.bf16.xpose.msra.mxu0 0
        %678 = vmatprep.subr.bf16.mxu0 0
        %679 = vmatpush1.bf16.xpose.msra.mxu0 0
        %680 = vmatprep.subr.bf16.mxu0 0
        %681 = vmatpush1.bf16.xpose.msra.mxu0 0
        %682 = vmatprep.subr.bf16.mxu0 0
        %683 = vmatpush1.bf16.xpose.msra.mxu0 0
        %684 = vmatprep.mubr.bf16.mxu0 0
        %685 = vmatmul.mubr.bf16.gmra.mrb[0].mxu0 %v647
        %v686 = vpop.f32.mrb[0].mxu0
        %v687 = vadd.f32 %v638, %v686
        %v688 = vpop.f32.mrb[0].mxu0
        %v689 = vpop.f32.mrb[0].mxu0
        %v690 = vpop.f32.mrb[0].mxu0
        %691 = vdwg.mxu0
        %v693 = vsel %vm645, %v628, 0
        %v696 = vsel %vm645, %v630, 0
        %698 = vmatprep.subr.bf16.mxu0 0
        %699 = vmatpush1.bf16.xpose.msra.mxu0 %v696
        %700 = vmatprep.subr.bf16.mxu0 0
        %701 = vmatpush1.bf16.xpose.msra.mxu0 0
        %702 = vmatprep.subr.bf16.mxu0 0
        %703 = vmatpush1.bf16.xpose.msra.mxu0 0
        %704 = vmatprep.subr.bf16.mxu0 0
        %705 = vmatpush1.bf16.xpose.msra.mxu0 0
        %706 = vmatprep.subr.bf16.mxu0 0
        %707 = vmatpush1.bf16.xpose.msra.mxu0 0
        %708 = vmatprep.subr.bf16.mxu0 0
        %709 = vmatpush1.bf16.xpose.msra.mxu0 0
        %710 = vmatprep.subr.bf16.mxu0 0
        %711 = vmatpush1.bf16.xpose.msra.mxu0 0
        %712 = vmatprep.subr.bf16.mxu0 0
        %713 = vmatpush1.bf16.xpose.msra.mxu0 0
        %714 = vmatprep.subr.bf16.mxu0 0
        %715 = vmatpush1.bf16.xpose.msra.mxu0 0
        %716 = vmatprep.subr.bf16.mxu0 0
        %717 = vmatpush1.bf16.xpose.msra.mxu0 0
        %718 = vmatprep.subr.bf16.mxu0 0
        %719 = vmatpush1.bf16.xpose.msra.mxu0 0
        %720 = vmatprep.subr.bf16.mxu0 0
        %721 = vmatpush1.bf16.xpose.msra.mxu0 0
        %722 = vmatprep.subr.bf16.mxu0 0
        %723 = vmatpush1.bf16.xpose.msra.mxu0 0
        %724 = vmatprep.subr.bf16.mxu0 0
        %725 = vmatpush1.bf16.xpose.msra.mxu0 0
        %726 = vmatprep.subr.bf16.mxu0 0
        %727 = vmatpush1.bf16.xpose.msra.mxu0 0
        %728 = vmatprep.subr.bf16.mxu0 0
        %729 = vmatpush1.bf16.xpose.msra.mxu0 0
        %730 = vmatprep.mubr.bf16.mxu0 0
        %731 = vmatmul.mubr.bf16.gmra.mrb[0].mxu0 %v693
        %v732 = vpop.f32.mrb[0].mxu0
        %v733 = vadd.f32 %v642, %v732
        %v734 = vpop.f32.mrb[0].mxu0
        %v735 = vpop.f32.mrb[0].mxu0
        %v736 = vpop.f32.mrb[0].mxu0
        %737 = vdwg.mxu0
        %v738 = vsel %vm645, %v687, -inf
        %739 = vmax.xlane.f32.xlu0 %v738
        %v740 = vpop.xlane.xlu0 %739
        %v741 = vsel %vm645, %v733, -inf
        %742 = vmax.xlane.f32.xlu0 %v741
        %v743 = vpop.xlane.xlu0 %742
        %v744 = vsub.f32 %v687, %v740
        %v745 = vsub.f32 %v733, %v743
        %v746 = vmul.f32 %v744, 1.442695
        %v747 = vpow.pop %v746
        %v748 = vmul.f32 %v745, 1.442695
        %v749 = vpow.pop %v748
        %v750 = vsel %vm645, %v747, 0.0
        %751 = vadd.xlane.f32.xlu0 %v750
        %v752 = vpop.xlane.xlu0 %751
        %v753 = vsel %vm645, %v749, 0.0
        %754 = vadd.xlane.f32.xlu0 %v753
        %v755 = vpop.xlane.xlu0 %754
        %v756 = vrcp.pop %v752
        %v757 = vrcp.pop %v755
        %v758 = vmul.f32 %v747, %v756
        %v759 = vmul.f32 %v749, %v757
        %v760 = vpack.c.bf16 %v758, %v758
        %v761 = vpack.c.bf16 %v759, %v759
        %v762 = vpack.c.bf16 %v621, %v621
        %v763 = vpack.c.bf16 %v624, %v624
        %v765 = vsel %vm645, %v760, 0
        %vm767 = vcmask 1043456
        %v769 = vsel %vm767, %v762, 0
        %771 = vmatprep.subr.bf16.mxu0 0
        %772 = vmatpush1.bf16.msra.mxu0 %v769
        %773 = vmatprep.subr.bf16.mxu0 0
        %774 = vmatpush1.bf16.msra.mxu0 0
        %775 = vmatprep.subr.bf16.mxu0 0
        %776 = vmatpush1.bf16.msra.mxu0 0
        %777 = vmatprep.subr.bf16.mxu0 0
        %778 = vmatpush1.bf16.msra.mxu0 0
        %779 = vmatprep.subr.bf16.mxu0 0
        %780 = vmatpush1.bf16.msra.mxu0 0
        %781 = vmatprep.subr.bf16.mxu0 0
        %782 = vmatpush1.bf16.msra.mxu0 0
        %783 = vmatprep.subr.bf16.mxu0 0
        %784 = vmatpush1.bf16.msra.mxu0 0
        %785 = vmatprep.subr.bf16.mxu0 0
        %786 = vmatpush1.bf16.msra.mxu0 0
        %787 = vmatprep.subr.bf16.mxu0 0
        %788 = vmatpush1.bf16.msra.mxu0 0
        %789 = vmatprep.subr.bf16.mxu0 0
        %790 = vmatpush1.bf16.msra.mxu0 0
        %791 = vmatprep.subr.bf16.mxu0 0
        %792 = vmatpush1.bf16.msra.mxu0 0
        %793 = vmatprep.subr.bf16.mxu0 0
        %794 = vmatpush1.bf16.msra.mxu0 0
        %795 = vmatprep.subr.bf16.mxu0 0
        %796 = vmatpush1.bf16.msra.mxu0 0
        %797 = vmatprep.subr.bf16.mxu0 0
        %798 = vmatpush1.bf16.msra.mxu0 0
        %799 = vmatprep.subr.bf16.mxu0 0
        %800 = vmatpush1.bf16.msra.mxu0 0
        %801 = vmatprep.subr.bf16.mxu0 0
        %802 = vmatpush1.bf16.msra.mxu0 0
        %803 = vmatprep.mubr.bf16.mxu0 0
        %804 = vmatmul.mubr.bf16.gmra.mrb[0].mxu0 %v765
        %v805 = vpop.f32.mrb[0].mxu0
        %v806 = vadd.f32 0.0, %v805
        %v807 = vpop.f32.mrb[0].mxu0
        %v808 = vpop.f32.mrb[0].mxu0
        %v809 = vpop.f32.mrb[0].mxu0
        %810 = vdwg.mxu0
        %v812 = vsel %vm645, %v761, 0
        %v815 = vsel %vm767, %v763, 0
        %817 = vmatprep.subr.bf16.mxu0 0
        %818 = vmatpush1.bf16.msra.mxu0 %v815
        %819 = vmatprep.subr.bf16.mxu0 0
        %820 = vmatpush1.bf16.msra.mxu0 0
        %821 = vmatprep.subr.bf16.mxu0 0
        %822 = vmatpush1.bf16.msra.mxu0 0
        %823 = vmatprep.subr.bf16.mxu0 0
        %824 = vmatpush1.bf16.msra.mxu0 0
        %825 = vmatprep.subr.bf16.mxu0 0
        %826 = vmatpush1.bf16.msra.mxu0 0
        %827 = vmatprep.subr.bf16.mxu0 0
        %828 = vmatpush1.bf16.msra.mxu0 0
        %829 = vmatprep.subr.bf16.mxu0 0
        %830 = vmatpush1.bf16.msra.mxu0 0
        %831 = vmatprep.subr.bf16.mxu0 0
        %832 = vmatpush1.bf16.msra.mxu0 0
        %833 = vmatprep.subr.bf16.mxu0 0
        %834 = vmatpush1.bf16.msra.mxu0 0
        %835 = vmatprep.subr.bf16.mxu0 0
        %836 = vmatpush1.bf16.msra.mxu0 0
        %837 = vmatprep.subr.bf16.mxu0 0
        %838 = vmatpush1.bf16.msra.mxu0 0
        %839 = vmatprep.subr.bf16.mxu0 0
        %840 = vmatpush1.bf16.msra.mxu0 0
        %841 = vmatprep.subr.bf16.mxu0 0
        %842 = vmatpush1.bf16.msra.mxu0 0
        %843 = vmatprep.subr.bf16.mxu0 0
        %844 = vmatpush1.bf16.msra.mxu0 0
        %845 = vmatprep.subr.bf16.mxu0 0
        %846 = vmatpush1.bf16.msra.mxu0 0
        %847 = vmatprep.subr.bf16.mxu0 0
        %848 = vmatpush1.bf16.msra.mxu0 0
        %849 = vmatprep.mubr.bf16.mxu0 0
        %850 = vmatmul.mubr.bf16.gmra.mrb[0].mxu0 %v812
        %v851 = vpop.f32.mrb[0].mxu0
        %v852 = vadd.f32 0.0, %v851
        %v853 = vpop.f32.mrb[0].mxu0
        %v854 = vpop.f32.mrb[0].mxu0
        %v855 = vpop.f32.mrb[0].mxu0
        %856 = vdwg.mxu0
        %v857 = vld [vmem:[#allocation2] sm:$0xff]
        %v858 = vld [vmem:[#allocation2 + $0x8] sm:$0xff]
        %v859 = vpack.c.bf16 %v852, %v806
        %v860 = vld [vmem:[%s411] sm:$0xf]
        %v862 = vsel %vm645, %v859, 0
        %v865 = vsel %vm767, %v860, 0
        %867 = vmatprep.subr.bf16.mxu0 0
        %868 = vmatpush1.bf16.msra.mxu0 %v865
        %869 = vmatprep.subr.bf16.mxu0 0
        %870 = vmatpush1.bf16.msra.mxu0 0
        %871 = vmatprep.subr.bf16.mxu0 0
        %872 = vmatpush1.bf16.msra.mxu0 0
        %873 = vmatprep.subr.bf16.mxu0 0
        %874 = vmatpush1.bf16.msra.mxu0 0
        %875 = vmatprep.subr.bf16.mxu0 0
        %876 = vmatpush1.bf16.msra.mxu0 0
        %877 = vmatprep.subr.bf16.mxu0 0
        %878 = vmatpush1.bf16.msra.mxu0 0
        %879 = vmatprep.subr.bf16.mxu0 0
        %880 = vmatpush1.bf16.msra.mxu0 0
        %881 = vmatprep.subr.bf16.mxu0 0
        %882 = vmatpush1.bf16.msra.mxu0 0
        %883 = vmatprep.subr.bf16.mxu0 0
        %884 = vmatpush1.bf16.msra.mxu0 0
        %885 = vmatprep.subr.bf16.mxu0 0
        %886 = vmatpush1.bf16.msra.mxu0 0
        %887 = vmatprep.subr.bf16.mxu0 0
        %888 = vmatpush1.bf16.msra.mxu0 0
        %889 = vmatprep.subr.bf16.mxu0 0
        %890 = vmatpush1.bf16.msra.mxu0 0
        %891 = vmatprep.subr.bf16.mxu0 0
        %892 = vmatpush1.bf16.msra.mxu0 0
        %893 = vmatprep.subr.bf16.mxu0 0
        %894 = vmatpush1.bf16.msra.mxu0 0
        %895 = vmatprep.subr.bf16.mxu0 0
        %896 = vmatpush1.bf16.msra.mxu0 0
        %897 = vmatprep.subr.bf16.mxu0 0
        %898 = vmatpush1.bf16.msra.mxu0 0
        %899 = vmatprep.mubr.bf16.mxu0 0
        %900 = vmatmul.mubr.bf16.gmra.mrb[0].mxu0 %v862
        %v901 = vpop.f32.mrb[0].mxu0
        %v902 = vadd.f32 0.0, %v901
        %v903 = vpop.f32.mrb[0].mxu0
        %v904 = vpop.f32.mrb[0].mxu0
        %v905 = vadd.f32 0.0, %v904
        %v906 = vpop.f32.mrb[0].mxu0
        %907 = vdwg.mxu0
        %v908 = vadd.f32 %v857, %v902
        %v909 = vadd.f32 %v858, %v905
        %910 = vst.msk [vmem:[#allocation2] sm:$0xff] %vm462, %v908
        %911 = vst.msk [vmem:[#allocation2 + $0x8] sm:$0xff] %vm462, %v909
        %p912 = scmp.eq.s32.totalorder %s31, 3
        // Predicated region
        $region53: #{tpu_custom_call.1} parent=47 // pred_check
          %p913 = pneg %p912
        $region54: #{tpu_custom_call.1} parent=47 // pred_check_branch
          %915 = sbr.rel (%p913) target = $region56
        $region55: #{tpu_custom_call.1} parent=47 // pred_region
          %v916 = vld [vmem:[#allocation2] sm:$0xff]
          %v917 = vld [vmem:[#allocation2 + $0x8] sm:$0xff]
          %918 = vst.msk [vmem:[#allocation6] sm:$0xff] %vm462, %v916
          %919 = vst.msk [vmem:[#allocation6 + $0x8] sm:$0xff] %vm462, %v917
        $region56: #{tpu_custom_call.1} parent=47 // pred_fallthru
          _
        // Predicated region
        $region57: #{tpu_custom_call.1} parent=47 // pred_check
          %p920 = pneg %p238
        $region58: #{tpu_custom_call.1} parent=47 // pred_check_branch
          %922 = sbr.rel (%p920) target = $region60
        $region59: #{tpu_custom_call.1} parent=47 // pred_region
          %s923 = smul.u32 2, %s30
          %s925 = ssub.s32 256, 256
          %926 = vsyncadd [#allocation7], %s925
          %s927 = smul.addr %s923, 128
          %s928 = scalar_lea.hbm %s8, %s927
          %s929 = sshll.u32 [#allocation6], 4
          %s930 = int_to_ptr.vmem [resolvable:$true] %s929
          %935 = dma.vmem_to_hbm [thread:$0]  %s930, 256, %s928, [#allocation7], 128, 128, 8
        $region60: #{tpu_custom_call.1} parent=47 // pred_fallthru
          _
        // Predicated region
        $region61: #{tpu_custom_call.1} parent=47 // pred_check
          %p936 = pneg %p238
        $region62: #{tpu_custom_call.1} parent=47 // pred_check_branch
          %938 = sbr.rel (%p936) target = $region64
        $region63: #{tpu_custom_call.1} parent=47 // pred_region
          %939 = dma.done [#allocation7], 256
        $region64: #{tpu_custom_call.1} parent=47 // pred_fallthru
          _
      $region48: #{tpu_custom_call.1} parent=5 // pred_fallthru
        _
      %p940 = scmp.le.s32.totalorder 2, %s21
      // Predicated region
      $region65: #{tpu_custom_call.1} parent=5 // pred_check
        %p941 = pneg %p940
      $region66: #{tpu_custom_call.1} parent=5 // pred_check_branch
        %943 = sbr.rel (%p941) target = $region68
      $region67: #{tpu_custom_call.1} parent=5 // pred_region
        %s944 = ssub.s32 %s21, 2
      $region68: #{tpu_custom_call.1} parent=5 // pred_fallthru
        _
    $region6: #{tpu_custom_call.1} parent=1 // loop_footer
      %s25 = sadd.s32 1, %s21
    $region7: #{tpu_custom_call.1} parent=1 // loop_footer_branch
      %20 = sbr.rel target = $region3
    $region8: #{tpu_custom_call.1} parent=1 // loop_exit
      _
    %945 = vsyncpa [#allocation7], 1
    %s946 = scalar_lea.sflag [#allocation7], 1
    %947 = vsyncpa %s946, 1

</llo_original>
